<compile_context>
chip_gen: v5e
topology: v5e:2x2
jax: 0.10.0
libtpu: 0.0.40
codegen_flags: <defaults>
</compile_context>

<pallas_src>
import functools

import jax
import jax.numpy as jnp
from jax.experimental import pallas as pl
from jax.experimental.pallas import tpu as pltpu

# Deterministic "trainer hyper-parameters" (would live on the concrete trainer).
LR = 0.05
WMIN = -1.0
WMAX = 1.0

# Tile targets.  Worst-case double-buffered working set with these caps is
# ~30 MiB, which fits every TPU generation (v5e/v6e 128 MiB physical, v7x
# 64 MiB per-core) with a 2-deep pipeline, so no per-generation branch needed.
_TM_TARGET = 512          # output-feature tile (weight sublane / post lane dim)
_TN_TARGET = 1024         # input-feature tile (weight / pre lane dim), mult of 128
_TK_TARGET = 512          # batch (reduction) tile
_FULL_BATCH_MAX = 1024    # drop the batch grid axis when padded batch <= this


def _ceil_to(x: int, m: int) -> int:
    return -(-x // m) * m


def _sublane_unit(dtype) -> int:
    """Sublane packing unit for a dtype (8 for f32, 16 for bf16, 32 for int8)."""
    return max(8, 32 // jnp.dtype(dtype).itemsize)


def _pick_tile(dim: int, unit: int, target: int) -> tuple[int, int]:
    """Pick (tile, padded_dim): tile a multiple of `unit` and <= ~target, chosen
    to minimize padding waste; padded_dim an exact multiple of tile."""
    padded_min = _ceil_to(dim, unit)
    if padded_min <= target:
        return padded_min, padded_min
    top = max(target - (target % unit), unit)
    best_tile, best_padded = None, None
    for tile in range(top, unit - 1, -unit):      # prefer larger tiles on ties
        padded = _ceil_to(dim, tile)
        if best_padded is None or padded < best_padded:
            best_tile, best_padded = tile, padded
    return best_tile, best_padded


def _fullbatch_step_kernel(pre_ref, post_ref, w_ref, w_out_ref, *, lr, wmin, wmax):
    """Full-batch path: pre (B, tn), post (B, tm), w/w_out (tm, tn).

    One big-K dot per weight tile, clamp, store.  bf16 cast happens here (cheap
    VPU op hidden under the MXU/DMA) instead of an extra HBM pass in the wrapper.
    """
    # TODO(synk): bf16 operands (f32 MXU accumulation); a trainer that requires
    # full-f32 Hebbian products should drop the astype below.
    dw = jax.lax.dot_general(
        post_ref[...].astype(jnp.bfloat16),
        pre_ref[...].astype(jnp.bfloat16),
        dimension_numbers=(((0,), (0,)), ((), ())),   # contract over batch
        preferred_element_type=jnp.float32,
    )
    w_out_ref[...] = jnp.clip(w_ref[...] + lr * dw, wmin, wmax)


def _batched_step_kernel(pre_ref, post_ref, w_ref, w_out_ref, *, lr, wmin, wmax):
    """Batch-tiled path: pre (tk, tn), post (tk, tm), w/w_out (tm, tn).

    The accumulator is the resident output block (out index map ignores k), so
    there is no scratch buffer and no zero-init store.
    """
    k = pl.program_id(3)
    dw = jax.lax.dot_general(
        post_ref[...].astype(jnp.bfloat16),
        pre_ref[...].astype(jnp.bfloat16),
        dimension_numbers=(((0,), (0,)), ((), ())),
        preferred_element_type=jnp.float32,
    )

    @pl.when(k == 0)
    def _():
        w_out_ref[...] = w_ref[...] + lr * dw

    @pl.when(k != 0)
    def _():
        w_out_ref[...] = w_out_ref[...] + lr * dw

    @pl.when(k == pl.num_programs(3) - 1)
    def _():
        w_out_ref[...] = jnp.clip(w_out_ref[...], wmin, wmax)


def cell_trainer_step(pre, post, weight, *, lr=LR, wmin=WMIN, wmax=WMAX,
                      tm_target=_TM_TARGET, tn_target=_TN_TARGET,
                      tk_target=_TK_TARGET, full_batch_max=_FULL_BATCH_MAX):
    """Applies one CellTrainer-style training step to cell weight(s).

    Accepts a single cell:
        pre (B, N_in), post (B, N_out), weight (N_out, N_in)
    or a stack of cells updated in one launch:
        pre (C, B, N_in), post (C, B, N_out), weight (C, N_out, N_in)
    """
    single = pre.ndim == 2
    if single:
        pre, post, weight = pre[None], post[None], weight[None]

    c, b, n_in = pre.shape
    cc, bb, n_out = post.shape
    assert (cc, bb) == (c, b)
    assert weight.shape == (c, n_out, n_in)

    # --- tile / pad sizes -----------------------------------------------
    # tm is the weight sublane dim AND the post lane dim: full-extent (8-aligned)
    # if it fits the target (+25% slack to avoid pad waste), else a 128-multiple.
    n_out_8 = _ceil_to(n_out, 8)
    if n_out_8 <= (tm_target * 5) // 4:
        tm = n_out_p = n_out_8
    else:
        tm, n_out_p = _pick_tile(n_out, 128, tm_target)

    # tn is the lane dim of both pre and weight: always a 128-multiple.
    n_in_128 = _ceil_to(n_in, 128)
    if n_in_128 <= (tn_target * 5) // 4:
        tn = n_in_p = n_in_128
    else:
        tn, n_in_p = _pick_tile(n_in, 128, tn_target)

    # tk is a sublane dim only (pre & post): multiple of the dtype packing unit.
    act_unit = max(_sublane_unit(pre.dtype), _sublane_unit(post.dtype))
    b_aligned = _ceil_to(b, act_unit)
    full_batch = b_aligned <= full_batch_max
    if full_batch:
        tk = b_p = b_aligned
    else:
        tk, b_p = _pick_tile(b, act_unit, max(_ceil_to(tk_target, act_unit), act_unit))

    # --- conditional pad / cast (skipped entirely for aligned inputs) -----
    def _prep(x, d1, d2, dtype=None):
        if dtype is not None and x.dtype != dtype:
            x = x.astype(dtype)
        p1, p2 = d1 - x.shape[1], d2 - x.shape[2]
        if p1 or p2:   # zero padding contributes nothing to dw; sliced off after
            x = jnp.pad(x, ((0, 0), (0, p1), (0, p2)))
        return x

    pre_p = _prep(pre, b_p, n_in_p)                     # keep dtype; cast in-kernel
    post_p = _prep(post, b_p, n_out_p)
    w_p = _prep(weight, n_out_p, n_in_p, jnp.float32)   # no copy if already aligned f32

    i_tiles, j_tiles = n_out_p // tm, n_in_p // tn

    if full_batch:
        grid = (c, i_tiles, j_tiles)
        in_specs = [
            pl.BlockSpec((None, b_p, tn), lambda ci, i, j: (ci, 0, j)),   # pre
            pl.BlockSpec((None, b_p, tm), lambda ci, i, j: (ci, 0, i)),   # post
            pl.BlockSpec((None, tm, tn), lambda ci, i, j: (ci, i, j)),    # weight
        ]
        out_spec = pl.BlockSpec((None, tm, tn), lambda ci, i, j: (ci, i, j))
        kernel = functools.partial(_fullbatch_step_kernel, lr=lr, wmin=wmin, wmax=wmax)
        dims = ("parallel", "parallel", "parallel")
        act_rows = b_p
    else:
        # reduction (batch) axis last, marked "arbitrary"
        grid = (c, i_tiles, j_tiles, b_p // tk)
        in_specs = [
            pl.BlockSpec((None, tk, tn), lambda ci, i, j, k: (ci, k, j)),   # pre
            pl.BlockSpec((None, tk, tm), lambda ci, i, j, k: (ci, k, i)),   # post
            pl.BlockSpec((None, tm, tn), lambda ci, i, j, k: (ci, i, j)),   # weight
        ]
        out_spec = pl.BlockSpec((None, tm, tn), lambda ci, i, j, k: (ci, i, j))
        kernel = functools.partial(_batched_step_kernel, lr=lr, wmin=wmin, wmax=wmax)
        dims = ("parallel", "parallel", "parallel", "arbitrary")
        act_rows = tk

    # VMEM working set (2-deep pipeline on every operand + aliased output tile).
    ws_bytes = (2 * act_rows * tn * pre_p.dtype.itemsize
                + 2 * act_rows * tm * post_p.dtype.itemsize
                + 4 * tm * tn * 4)
    vmem_limit = int(min(max(32 << 20, (ws_bytes * 5) // 4 + (2 << 20)), 48 << 20))

    cost = pl.CostEstimate(
        flops=int(2 * c * b_p * n_out_p * n_in_p),
        transcendentals=0,
        bytes_accessed=int(
            c * (i_tiles * b_p * n_in_p * pre_p.dtype.itemsize      # pre re-read per out-row tile
                 + j_tiles * b_p * n_out_p * post_p.dtype.itemsize  # post re-read per in-col tile
                 + 2 * 4 * n_out_p * n_in_p)),                      # f32 weight read + write
    )

    out = pl.pallas_call(
        kernel,
        out_shape=jax.ShapeDtypeStruct((c, n_out_p, n_in_p), jnp.float32),
        grid_spec=pltpu.PrefetchScalarGridSpec(
            num_scalar_prefetch=0,
            grid=grid,
            in_specs=in_specs,
            out_specs=out_spec,
        ),
        compiler_params=pltpu.CompilerParams(
            dimension_semantics=dims,
            vmem_limit_bytes=vmem_limit,
        ),
        input_output_aliases={2: 0},   # update the weight buffer in place
        cost_estimate=cost,
    )(pre_p, post_p, w_p)

    out = out[:, :n_out, :n_in]
    return out[0] if single else out


# TODO(synk): CellTrainer.forward is abstract (raises NotImplementedError); the
# monitor pool / weakref cell registry / aux-state ModuleDict / train()/clear()
# are pure-Python object management with no tensor equivalent and are not emulated.


if __name__ == "__main__":
    key = jax.random.PRNGKey(0)
    keys = jax.random.split(key, 9)

    def reference(pre, post, w):
        dw = jnp.einsum("...bo,...bi->...oi",
                        post.astype(jnp.bfloat16), pre.astype(jnp.bfloat16),
                        preferred_element_type=jnp.float32)
        return jnp.clip(w + LR * dw, WMIN, WMAX)

    # --- 1) single small cell (full-batch fast path) -------------------------
    B, N_IN, N_OUT = 8, 32, 16
    pre = jax.random.uniform(keys[0], (B, N_IN), dtype=jnp.float32)
    post = jax.random.uniform(keys[1], (B, N_OUT), dtype=jnp.float32)
    weight = 0.1 * jax.random.normal(keys[2], (N_OUT, N_IN), dtype=jnp.float32)

    w_new = jax.block_until_ready(cell_trainer_step(pre, post, weight))
    assert w_new.shape == (N_OUT, N_IN)
    assert jnp.allclose(w_new, reference(pre, post, weight), atol=1e-4, rtol=1e-3)

    # --- 2) stack of cells updated in one launch -----------------------------
    C = 3
    pre_c = jax.random.uniform(keys[3], (C, B, N_IN), dtype=jnp.float32)
    post_c = jax.random.uniform(keys[4], (C, B, N_OUT), dtype=jnp.float32)
    w_c = 0.1 * jax.random.normal(keys[5], (C, N_OUT, N_IN), dtype=jnp.float32)

    w_c_new = jax.block_until_ready(cell_trainer_step(pre_c, post_c, w_c))
    assert w_c_new.shape == (C, N_OUT, N_IN)
    assert jnp.allclose(w_c_new, reference(pre_c, post_c, w_c), atol=1e-4, rtol=1e-3)

    # --- 3) batch-tiled path (tiling forced via small tile targets) ----------
    B3, N_IN3, N_OUT3 = 32, 256, 256
    pre3 = jax.random.uniform(keys[6], (B3, N_IN3), dtype=jnp.float32)
    post3 = jax.random.uniform(keys[7], (B3, N_OUT3), dtype=jnp.float32)
    w3 = 0.1 * jax.random.normal(keys[8], (N_OUT3, N_IN3), dtype=jnp.float32)

    w3_new = jax.block_until_ready(
        cell_trainer_step(pre3, post3, w3,
                          tm_target=128, tn_target=128, tk_target=8,
                          full_batch_max=8))
    assert w3_new.shape == (N_OUT3, N_IN3)
    assert jnp.allclose(w3_new, reference(pre3, post3, w3), atol=1e-4, rtol=1e-3)

    print("KERNEL_OK")
</pallas_src>

<mosaic_0001>
module attributes {stable_mosaic.version = 11 : i64} {
  func.func @_fullbatch_step_kernel(%arg0: i32, %arg1: i32, %arg2: i32, %arg3: memref<1x8x128xf32, #tpu.memory_space<vmem>>, %arg4: memref<1x8x16xf32, #tpu.memory_space<vmem>>, %arg5: memref<1x16x128xf32, #tpu.memory_space<vmem>>, %arg6: memref<1x16x128xf32, #tpu.memory_space<vmem>>) attributes {dimension_semantics = [#tpu.dimension_semantics<parallel>, #tpu.dimension_semantics<parallel>, #tpu.dimension_semantics<parallel>], iteration_bounds = array<i64: 1, 1, 1>, scalar_prefetch = 0 : i64, scratch_operands = 0 : i64, tpu.core_type = #tpu.core_type<tc>, window_params = [{transform_indices = @transform_0, window_bounds = array<i64: 1, 8, 128>}, {transform_indices = @transform_1, window_bounds = array<i64: 1, 8, 16>}, {transform_indices = @transform_2, window_bounds = array<i64: 1, 16, 128>}, {transform_indices = @transform_3, window_bounds = array<i64: 1, 16, 128>}]} {
    %c0 = arith.constant 0 : index
    %c0_0 = arith.constant 0 : index
    %c0_1 = arith.constant 0 : index
    %0 = vector.load %arg4[%c0, %c0_0, %c0_1] : memref<1x8x16xf32, #tpu.memory_space<vmem>>, vector<1x8x16xf32>
    %1 = vector.shape_cast %0 : vector<1x8x16xf32> to vector<8x16xf32>
    %2 = arith.truncf %1 : vector<8x16xf32> to vector<8x16xbf16>
    %c0_2 = arith.constant 0 : index
    %c0_3 = arith.constant 0 : index
    %c0_4 = arith.constant 0 : index
    %3 = vector.load %arg3[%c0_2, %c0_3, %c0_4] : memref<1x8x128xf32, #tpu.memory_space<vmem>>, vector<1x8x128xf32>
    %4 = vector.shape_cast %3 : vector<1x8x128xf32> to vector<8x128xf32>
    %5 = arith.truncf %4 : vector<8x128xf32> to vector<8x128xbf16>
    %cst = arith.constant dense<0.000000e+00> : vector<16x128xf32>
    %6 = tpu.matmul %2, %5, %cst {dimension_numbers = #tpu.dot_dimension_numbers<[0], [0], [1], [1], [0, 1, 1, 1], [], []>} : vector<8x16xbf16>, vector<8x128xbf16>, vector<16x128xf32> -> vector<16x128xf32>
    %c0_5 = arith.constant 0 : index
    %c0_6 = arith.constant 0 : index
    %c0_7 = arith.constant 0 : index
    %7 = vector.load %arg5[%c0_5, %c0_6, %c0_7] : memref<1x16x128xf32, #tpu.memory_space<vmem>>, vector<1x16x128xf32>
    %8 = vector.shape_cast %7 : vector<1x16x128xf32> to vector<16x128xf32>
    %cst_8 = arith.constant 5.000000e-02 : f32
    %9 = vector.broadcast %cst_8 : f32 to vector<16x128xf32>
    %10 = arith.mulf %9, %6 : vector<16x128xf32>
    %11 = arith.addf %8, %10 : vector<16x128xf32>
    %cst_9 = arith.constant -1.000000e+00 : f32
    %cst_10 = arith.constant 1.000000e+00 : f32
    %12 = vector.broadcast %cst_9 : f32 to vector<16x128xf32>
    %13 = arith.maximumf %12, %11 : vector<16x128xf32>
    %14 = vector.broadcast %cst_10 : f32 to vector<16x128xf32>
    %15 = arith.minimumf %14, %13 : vector<16x128xf32>
    %c0_11 = arith.constant 0 : index
    %c0_12 = arith.constant 0 : index
    %c0_13 = arith.constant 0 : index
    %16 = vector.load %arg6[%c0_11, %c0_12, %c0_13] : memref<1x16x128xf32, #tpu.memory_space<vmem>>, vector<1x16x128xf32>
    %17 = vector.shape_cast %16 : vector<1x16x128xf32> to vector<16x128xf32>
    %18 = vector.shape_cast %15 : vector<16x128xf32> to vector<1x16x128xf32>
    tpu.vector_store %arg6[%c0_11, %c0_12, %c0_13], %18 {strides = array<i32>} : memref<1x16x128xf32, #tpu.memory_space<vmem>>, vector<1x16x128xf32>,
    return
  }
  func.func @transform_0(%arg0: i32, %arg1: i32, %arg2: i32) -> (i32, i32, i32) {
    %c0_i32 = arith.constant 0 : i32
    %c0_i32_0 = arith.constant 0 : i32
    return %arg0, %c0_i32, %arg2 : i32, i32, i32
  }
  func.func @transform_1(%arg0: i32, %arg1: i32, %arg2: i32) -> (i32, i32, i32) {
    %c0_i32 = arith.constant 0 : i32
    %c0_i32_0 = arith.constant 0 : i32
    return %arg0, %c0_i32, %arg1 : i32, i32, i32
  }
  func.func @transform_2(%arg0: i32, %arg1: i32, %arg2: i32) -> (i32, i32, i32) {
    %c0_i32 = arith.constant 0 : i32
    return %arg0, %arg1, %arg2 : i32, i32, i32
  }
  func.func @transform_3(%arg0: i32, %arg1: i32, %arg2: i32) -> (i32, i32, i32) {
    %c0_i32 = arith.constant 0 : i32
    return %arg0, %arg1, %arg2 : i32, i32, i32
  }
}

</mosaic_0001>

<llo_original>
// kernel: tpu_custom_call.1
$region0: #{tpu_custom_call.1}
  #allocation0 [shape = 'u32[]', space=smem, size = 0x4, offset = 0x4, fixed_abs, tag = 'smem constant byte address 0x4 - core index']
  #allocation1 [shape = 'u32[72,128]{1,0:T(1,128)}', space=vmem, size = 0x9000, scoped, tag = 'internal scratch']
  %s0 = inlined_call_operand.vmem [shape: f32[1,8,128], index: 0, kind: input, shape index: {}]
  %s1 = inlined_call_operand.vmem [shape: f32[1,8,16], index: 1, kind: input, shape index: {}]
  %s2 = inlined_call_operand.hbm [shape: f32[1,16,128], index: 2, kind: input, shape index: {}, may-alias: {2,3}]
  %s3 = inlined_call_operand.hbm [shape: f32[1,16,128], index: 3, kind: output, shape index: {}, may-alias: {2,3}]
  %s4 = sld [smem:[#allocation0]]
  $region26: #{tpu_custom_call.1} parent=0
    _
  %s6 = ssub.s32 1, %s4
  %s7 = scalar_select 0, %s6, %s4
  $region1: #{tpu_custom_call.1} parent=0
    #allocation2 [shape = 'u8[8192]{0}', space=vmem, size = 0x2000, scoped, tag = 'input window, operand 2, single buffered']
    #allocation3 [shape = 's32[1]{0}', space=sflag, size = 0x4, scoped, tag = 'scoped memory for tpu_custom_call.1']
    #allocation4 [shape = 's32[1]{0}', space=sflag, size = 0x4, scoped, tag = 'scoped memory for tpu_custom_call.1']
    #allocation5 [shape = 'u8[8192]{0}', space=vmem, size = 0x2000, scoped, tag = 'output window, operand 0, single buffered']
    %8 = vsyncpa [#allocation3], 0
    %9 = vsyncpa [#allocation4], 0
    // Predicated region
    $region2: #{tpu_custom_call.1} parent=1 // pred_check
      _
    $region3: #{tpu_custom_call.1} parent=1 // pred_check_branch
      %11 = sbr.rel (0) target = $region5
    $region4: #{tpu_custom_call.1} parent=1 // pred_region
      _
    $region5: #{tpu_custom_call.1} parent=1 // pred_fallthru
      _
    // Predicated region
    $region6: #{tpu_custom_call.1} parent=1 // pred_check
      _
    $region7: #{tpu_custom_call.1} parent=1 // pred_check_branch
      %13 = sbr.rel (0) target = $region9
    $region8: #{tpu_custom_call.1} parent=1 // pred_region
      _
    $region9: #{tpu_custom_call.1} parent=1 // pred_fallthru
      _
    // Predicated region
    $region10: #{tpu_custom_call.1} parent=1 // pred_check
      _
    $region11: #{tpu_custom_call.1} parent=1 // pred_check_branch
      %15 = sbr.rel (0) target = $region13
    $region12: #{tpu_custom_call.1} parent=1 // pred_region
      %17 = vsyncadd [#allocation3], 0
      %s18 = sshll.u32 %s2, 4
      %s19 = int_to_ptr.hbm [resolvable:$true] %s18
      %s20 = sshll.u32 [#allocation2], 4
      %s21 = int_to_ptr.vmem [resolvable:$true] %s20
      %26 = dma.hbm_to_vmem [thread:$0]  %s19, 256, %s21, [#allocation3], 128, 128, 8
    $region13: #{tpu_custom_call.1} parent=1 // pred_fallthru
      _
    // Predicated region
    $region14: #{tpu_custom_call.1} parent=1 // pred_check
      _
    $region15: #{tpu_custom_call.1} parent=1 // pred_check_branch
      %28 = sbr.rel (0) target = $region17
    $region16: #{tpu_custom_call.1} parent=1 // pred_region
      %30 = dma.done [#allocation3], 256
    $region17: #{tpu_custom_call.1} parent=1 // pred_fallthru
      _
    %v32 = vld [vmem:[%s1] sm:$0xff]
    %v33 = vpack.c.bf16 %v32, %v32
    %v34 = vld [vmem:[%s0] sm:$0xff]
    %v35 = vpack.c.bf16 %v34, %v34
    %36 = vxpose.xlu0.c.b16.start [1/8] %v33, 128
    %37 = vxpose.xlu0.c.b16.cont [2/8] 0, 128
    %38 = vxpose.xlu0.c.b16.cont [3/8] 0, 128
    %39 = vxpose.xlu0.c.b16.cont [4/8] 0, 128
    %40 = vxpose.xlu0.c.b16.cont [5/8] 0, 128
    %41 = vxpose.xlu0.c.b16.cont [6/8] 0, 128
    %42 = vxpose.xlu0.c.b16.cont [7/8] 0, 128
    %43 = vxpose.xlu0.c.b16.end [8/8] 0, 128
    %v44 = vpop.trf.xlu0
    %v45 = vpop.trf.xlu0
    %v46 = vpop.trf.xlu0
    %v47 = vpop.trf.xlu0
    %v48 = vpop.trf.xlu0
    %v49 = vpop.trf.xlu0
    %v50 = vpop.trf.xlu0
    %v51 = vpop.trf.xlu0
    %vm52 = vcmask 64512
    %v54 = vsel %vm52, %v44, 0
    %vm56 = vcmask 1043456
    %v58 = vsel %vm56, %v35, 0
    %60 = vmatpush.bf16.msra.mxu0 0
    %61 = vmatpush.bf16.msra.mxu0 0
    %62 = vmatpush.bf16.msra.mxu0 0
    %63 = vmatpush.bf16.msra.mxu0 0
    %64 = vmatpush.bf16.msra.mxu0 0
    %65 = vmatpush.bf16.msra.mxu0 0
    %66 = vmatpush.bf16.msra.mxu0 0
    %67 = vmatpush.bf16.msra.mxu0 %v58
    %68 = vmatmul.bf16.gmra.mxu0 %v54
    %v69 = vpop.f32.mrf.mxu0
    %v70 = vadd.f32 0.0, %v69
    %v71 = vpop.f32.mrf.mxu0
    %v72 = vadd.f32 0.0, %v71
    %73 = vdwg.mxu0
    %v74 = vld [vmem:[#allocation2] sm:$0xff]
    %v75 = vld [vmem:[#allocation2 + $0x8] sm:$0xff]
    %v76 = vmul.f32 %v70, 0.05
    %v77 = vmul.f32 %v72, 0.05
    %v78 = vadd.f32 %v74, %v76
    %v79 = vadd.f32 %v75, %v77
    %v80 = vmax.f32 %v78, -1.0
    %v81 = vmax.f32 %v79, -1.0
    %v82 = vmin.f32 %v80, 1.0
    %v83 = vmin.f32 %v81, 1.0
    %84 = vst [vmem:[#allocation5] sm:$0xff] %v82
    %85 = vst [vmem:[#allocation5 + $0x8] sm:$0xff] %v83
    // Predicated region
    $region18: #{tpu_custom_call.1} parent=1 // pred_check
      _
    $region19: #{tpu_custom_call.1} parent=1 // pred_check_branch
      %87 = sbr.rel (0) target = $region21
    $region20: #{tpu_custom_call.1} parent=1 // pred_region
      %89 = vsyncadd [#allocation4], 0
      %s90 = sshll.u32 [#allocation5], 4
      %s91 = int_to_ptr.vmem [resolvable:$true] %s90
      %s92 = sshll.u32 %s3, 4
      %s93 = int_to_ptr.hbm [resolvable:$true] %s92
      %98 = dma.vmem_to_hbm [thread:$0]  %s91, 256, %s93, [#allocation4], 128, 128, 8
    $region21: #{tpu_custom_call.1} parent=1 // pred_fallthru
      _
    // Predicated region
    $region22: #{tpu_custom_call.1} parent=1 // pred_check
      _
    $region23: #{tpu_custom_call.1} parent=1 // pred_check_branch
      %100 = sbr.rel (0) target = $region25
    $region24: #{tpu_custom_call.1} parent=1 // pred_region
      %102 = dma.done [#allocation4], 256
    $region25: #{tpu_custom_call.1} parent=1 // pred_fallthru
      _
    %103 = vsyncpa [#allocation3], 1
    %104 = vsyncpa [#allocation4], 1

</llo_original>
